<compile_context>
chip_gen: v7x
topology: tpu7x:2x2x1
jax: 0.10.0
libtpu: 0.0.40
codegen_flags: <defaults>
</compile_context>

<pallas_src>
import functools

import jax
import jax.numpy as jnp
from jax.experimental import pallas as pl
from jax.experimental.pallas import tpu as pltpu


_LANE_W = 1024        # lane-dense column width (8 x 128 lanes)
_DEFAULT_TM = 512     # row tile: 512 x 1024 f32 = 2 MiB per VMEM buffer


def _silu_kernel(x_ref, o_ref):
    # x_ref / o_ref : (tm, _LANE_W) tiles resident in VMEM.
    x = x_ref[...].astype(jnp.float32)
    y = x * jax.nn.sigmoid(x)          # sigmoid -> EUP slot, mul -> VPU slot
    o_ref[...] = y.astype(o_ref.dtype)


def _sublane_multiple(dtype) -> int:
    """Minimum sublane (second-minor) multiple for a packed dtype tile."""
    itemsize = jnp.dtype(dtype).itemsize
    if itemsize >= 4:
        return 8
    if itemsize == 2:
        return 16
    return 32


@functools.partial(jax.jit, static_argnames=("tm",))
def silu_pallas(x, *, tm=_DEFAULT_TM):
    """Elementwise SiLU: x of any shape -> same shape/dtype."""
    orig_shape = x.shape
    orig_dtype = x.dtype
    n = x.size

    sub = _sublane_multiple(orig_dtype)

    # Number of (LANE_W)-wide rows needed, rounded up to the sublane multiple.
    rows = pl.cdiv(n, _LANE_W)
    rows = ((rows + sub - 1) // sub) * sub

    # Clamp the row tile for small problems; keep it a sublane multiple.
    tm_eff = min(tm, rows)
    tm_eff = max(sub, (tm_eff // sub) * sub)

    # Pad rows so every grid block is a full (tm_eff, LANE_W) tile.
    rows_pad = ((rows + tm_eff - 1) // tm_eff) * tm_eff
    total = rows_pad * _LANE_W

    flat = x.reshape(-1)
    if total != n:
        flat = jnp.pad(flat, (0, total - n))
    x2d = flat.reshape(rows_pad, _LANE_W)

    grid = (rows_pad // tm_eff,)

    itemsize = jnp.dtype(orig_dtype).itemsize
    cost = pl.CostEstimate(
        flops=4 * n,              # mul + sigmoid arithmetic-ish work
        transcendentals=n,        # one exp per element
        bytes_accessed=2 * n * itemsize,
    )

    out2d = pl.pallas_call(
        _silu_kernel,
        out_shape=jax.ShapeDtypeStruct((rows_pad, _LANE_W), orig_dtype),
        grid_spec=pltpu.PrefetchScalarGridSpec(
            num_scalar_prefetch=0,
            grid=grid,
            in_specs=[pl.BlockSpec((tm_eff, _LANE_W), lambda i: (i, 0))],
            out_specs=pl.BlockSpec((tm_eff, _LANE_W), lambda i: (i, 0)),
        ),
        compiler_params=pltpu.CompilerParams(
            dimension_semantics=("parallel",),
        ),
        cost_estimate=cost,
    )(x2d)

    return out2d.reshape(-1)[:n].reshape(orig_shape)


def _reference_silu(x):
    return x * jax.nn.sigmoid(x)


if __name__ == "__main__":
    # Small deterministic input (SiLU is elementwise; any shape works).
    key = jax.random.PRNGKey(0)
    x = jax.random.normal(key, (2, 4, 16, 16), dtype=jnp.float32)

    out = silu_pallas(x)
    out = jax.block_until_ready(out)

    ref = _reference_silu(x)
    assert out.shape == x.shape
    assert out.dtype == x.dtype
    assert jnp.allclose(out, ref, atol=1e-6, rtol=1e-6), "mismatch vs reference"

    print("KERNEL_OK")
</pallas_src>

<mosaic_0001>
module attributes {stable_mosaic.version = 11 : i64} {
  func.func @_silu_kernel(%arg0: i32, %arg1: memref<8x1024xf32, #tpu.memory_space<vmem>>, %arg2: memref<8x1024xf32, #tpu.memory_space<vmem>>) attributes {dimension_semantics = [#tpu.dimension_semantics<parallel>], iteration_bounds = array<i64: 1>, scalar_prefetch = 0 : i64, scratch_operands = 0 : i64, tpu.core_type = #tpu.core_type<tc>, window_params = [{transform_indices = @transform_0, window_bounds = array<i64: 8, 1024>}, {transform_indices = @transform_1, window_bounds = array<i64: 8, 1024>}]} {
    %c0 = arith.constant 0 : index
    %c0_0 = arith.constant 0 : index
    %0 = vector.load %arg1[%c0, %c0_0] : memref<8x1024xf32, #tpu.memory_space<vmem>>, vector<8x1024xf32>
    %1 = arith.negf %0 : vector<8x1024xf32>
    %2 = math.exp %1 : vector<8x1024xf32>
    %cst = arith.constant 1.000000e+00 : f32
    %3 = vector.broadcast %cst : f32 to vector<8x1024xf32>
    %4 = arith.addf %3, %2 : vector<8x1024xf32>
    %5 = arith.divf %3, %4 : vector<8x1024xf32>
    %6 = arith.mulf %0, %5 : vector<8x1024xf32>
    %c0_1 = arith.constant 0 : index
    %c0_2 = arith.constant 0 : index
    %7 = vector.load %arg2[%c0_1, %c0_2] : memref<8x1024xf32, #tpu.memory_space<vmem>>, vector<8x1024xf32>
    tpu.vector_store %arg2[%c0_1, %c0_2], %6 {strides = array<i32>} : memref<8x1024xf32, #tpu.memory_space<vmem>>, vector<8x1024xf32>,
    return
  }
  func.func @transform_0(%arg0: i32) -> (i32, i32) {
    %c0_i32 = arith.constant 0 : i32
    %c0_i32_0 = arith.constant 0 : i32
    return %arg0, %c0_i32 : i32, i32
  }
  func.func @transform_1(%arg0: i32) -> (i32, i32) {
    %c0_i32 = arith.constant 0 : i32
    %c0_i32_0 = arith.constant 0 : i32
    return %arg0, %c0_i32 : i32, i32
  }
}

</mosaic_0001>

<llo_original>
// kernel: silu_pallas.1
$region0: #{silu_pallas.1}
  #allocation0 [shape = 'u32[]', space=smem, size = 0x4, offset = 0x4, fixed_abs, tag = 'smem constant byte address 0x4 - core index']
  #allocation1 [shape = 'u32[144,128]{1,0:T(1,128)}', space=vmem, size = 0x12000, scoped, tag = 'internal scratch']
  %s0 = inlined_call_operand.vmem [shape: f32[8,1024], index: 0, kind: input, shape index: {}]
  %s1 = inlined_call_operand.vmem [shape: f32[8,1024], index: 1, kind: output, shape index: {}]
  %s2 = sld [smem:[#allocation0]]
  $region14: #{silu_pallas.1} parent=0
    _
  %s4 = ssub.s32 1, %s2
  %s5 = scalar_select 0, %s4, %s2
  // Predicated region
  $region2: #{silu_pallas.1} parent=0 // pred_check
    _
  $region3: #{silu_pallas.1} parent=0 // pred_check_branch
    %7 = sbr.rel (0) target = $region5
  $region4: #{silu_pallas.1} parent=0 // pred_region
    _
  $region5: #{silu_pallas.1} parent=0 // pred_fallthru
    _
  %v8 = vld [vmem:[%s0] sm:$0xff]
  %v9 = vld [vmem:[%s0 + $0x8] sm:$0xff]
  %v10 = vld [vmem:[%s0 + $0x10] sm:$0xff]
  %v11 = vld [vmem:[%s0 + $0x18] sm:$0xff]
  %v12 = vld [vmem:[%s0 + $0x20] sm:$0xff]
  %v13 = vld [vmem:[%s0 + $0x28] sm:$0xff]
  %v14 = vld [vmem:[%s0 + $0x30] sm:$0xff]
  %v15 = vld [vmem:[%s0 + $0x38] sm:$0xff]
  %v16 = vxor.u32 %v8, 2147483648
  %v17 = vxor.u32 %v9, 2147483648
  %v18 = vxor.u32 %v10, 2147483648
  %v19 = vxor.u32 %v11, 2147483648
  %v20 = vxor.u32 %v12, 2147483648
  %v21 = vxor.u32 %v13, 2147483648
  %v22 = vxor.u32 %v14, 2147483648
  %v23 = vxor.u32 %v15, 2147483648
  %v24 = vmul.f32 %v16, 1.442695
  %v25 = vpow.pop %v24
  %v26 = vmul.f32 %v17, 1.442695
  %v27 = vpow.pop %v26
  %v28 = vmul.f32 %v18, 1.442695
  %v29 = vpow.pop %v28
  %v30 = vmul.f32 %v19, 1.442695
  %v31 = vpow.pop %v30
  %v32 = vmul.f32 %v20, 1.442695
  %v33 = vpow.pop %v32
  %v34 = vmul.f32 %v21, 1.442695
  %v35 = vpow.pop %v34
  %v36 = vmul.f32 %v22, 1.442695
  %v37 = vpow.pop %v36
  %v38 = vmul.f32 %v23, 1.442695
  %v39 = vpow.pop %v38
  %v40 = vadd.f32 %v25, 1.0
  %v41 = vadd.f32 %v27, 1.0
  %v42 = vadd.f32 %v29, 1.0
  %v43 = vadd.f32 %v31, 1.0
  %v44 = vadd.f32 %v33, 1.0
  %v45 = vadd.f32 %v35, 1.0
  %v46 = vadd.f32 %v37, 1.0
  %v47 = vadd.f32 %v39, 1.0
  %v48 = vrcp.pop %v40
  %v49 = vmul.f32 1.0, %v48
  %v50 = vrcp.pop %v41
  %v51 = vmul.f32 1.0, %v50
  %v52 = vrcp.pop %v42
  %v53 = vmul.f32 1.0, %v52
  %v54 = vrcp.pop %v43
  %v55 = vmul.f32 1.0, %v54
  %v56 = vrcp.pop %v44
  %v57 = vmul.f32 1.0, %v56
  %v58 = vrcp.pop %v45
  %v59 = vmul.f32 1.0, %v58
  %v60 = vrcp.pop %v46
  %v61 = vmul.f32 1.0, %v60
  %v62 = vrcp.pop %v47
  %v63 = vmul.f32 1.0, %v62
  %v64 = vmul.f32 %v8, %v49
  %v65 = vmul.f32 %v9, %v51
  %v66 = vmul.f32 %v10, %v53
  %v67 = vmul.f32 %v11, %v55
  %v68 = vmul.f32 %v12, %v57
  %v69 = vmul.f32 %v13, %v59
  %v70 = vmul.f32 %v14, %v61
  %v71 = vmul.f32 %v15, %v63
  %72 = vst [vmem:[%s1] sm:$0xff] %v64
  %73 = vst [vmem:[%s1 + $0x8] sm:$0xff] %v65
  %74 = vst [vmem:[%s1 + $0x10] sm:$0xff] %v66
  %75 = vst [vmem:[%s1 + $0x18] sm:$0xff] %v67
  %76 = vst [vmem:[%s1 + $0x20] sm:$0xff] %v68
  %77 = vst [vmem:[%s1 + $0x28] sm:$0xff] %v69
  %78 = vst [vmem:[%s1 + $0x30] sm:$0xff] %v70
  %79 = vst [vmem:[%s1 + $0x38] sm:$0xff] %v71
  // Predicated region
  $region6: #{silu_pallas.1} parent=0 // pred_check
    _
  $region7: #{silu_pallas.1} parent=0 // pred_check_branch
    %81 = sbr.rel (0) target = $region9
  $region8: #{silu_pallas.1} parent=0 // pred_region
    _
  $region9: #{silu_pallas.1} parent=0 // pred_fallthru
    _
  // Predicated region
  $region10: #{silu_pallas.1} parent=0 // pred_check
    _
  $region11: #{silu_pallas.1} parent=0 // pred_check_branch
    %83 = sbr.rel (0) target = $region13
  $region12: #{silu_pallas.1} parent=0 // pred_region
    _
  $region13: #{silu_pallas.1} parent=0 // pred_fallthru
    _

</llo_original>
